<compile_context>
chip_gen: v5e
topology: v5e:2x2
jax: 0.10.0
libtpu: 0.0.40
codegen_flags: <defaults>
</compile_context>

<pallas_src>
import jax
import jax.numpy as jnp
from jax.experimental import pallas as pl
from jax.experimental.pallas import tpu as pltpu


def _summary_kernel(cls_ref, wf_ref, bf_ref, o_ref):
    """Grid = (batch-tile m, layer l, K-tile k); reduction axes (l, k) last.

    cls_ref : [1, TM, TK]  bf16  CLS activations of layer l, K-slice k
    wf_ref  : [1, TK, H ]  bf16  folded weight slab for (l, k)
    bf_ref  : [1, H]       f32   folded bias (block index constant -> resident)
    o_ref   : [TM, H]      f32   output block; its block index depends only on
                                 m, so it stays VMEM-resident across (l, k)
                                 and serves as the f32 accumulator.
    """
    l = pl.program_id(1)
    k = pl.program_id(2)

    @pl.when(jnp.logical_and(l == 0, k == 0))
    def _init():
        o_ref[...] = jnp.broadcast_to(bf_ref[...], o_ref.shape)

    # o += cls[l, :, k*TK:(k+1)*TK] @ Wf[l, k*TK:(k+1)*TK, :]
    # bf16 operands, f32 accumulation on the MXU.
    o_ref[...] += jnp.dot(
        cls_ref[0], wf_ref[0], preferred_element_type=jnp.float32
    )

    @pl.when(
        jnp.logical_and(
            l == pl.num_programs(1) - 1, k == pl.num_programs(2) - 1
        )
    )
    def _finalize():
        o_ref[...] = jnp.tanh(o_ref[...])


def _choose_tk(hidden_size):
    """K tile so the double-buffered bf16 weight slab stays <= ~16 MiB
    (fits the 32 MiB scoped-VMEM default and v7x's 64 MiB physical VMEM)."""
    budget_elems = (16 << 20) // (2 * 2)        # elements per (TK * H) slab
    if hidden_size * hidden_size <= budget_elems:
        return hidden_size
    for tk in (2048, 1024, 512, 256, 128):
        if (tk < hidden_size and hidden_size % tk == 0
                and tk * hidden_size <= budget_elems):
            return tk
    # TODO(synk): huge H not divisible by 128 would need lane padding; real
    # hidden sizes (multiples of 128) never reach this fallback.
    return hidden_size


def prepare_params(params, summary_layers):
    """One-time parameter prep.  Keep OUT of the per-call hot path.

    Folds the pooler into the first linear (exact in real arithmetic):
        Wf = W1 @ W2  (then reshape [SL, H, H]),   bf = b1 @ W2 + b2.
    Fold in f32, cast the result to bf16 once.
    """
    w1 = params["w1"].astype(jnp.float32)       # [SL*H, H] == torch weight.T
    w2 = params["w2"].astype(jnp.float32)       # [H, H]    == torch weight.T
    b1 = params["b1"].astype(jnp.float32)
    b2 = params["b2"].astype(jnp.float32)
    H = w2.shape[0]
    wf = (w1 @ w2).reshape(summary_layers, H, H).astype(jnp.bfloat16)
    bf = (b1 @ w2 + b2).reshape(1, H).astype(jnp.float32)
    return {"wf": wf, "bf": bf}


def sequence_summary_layer(hidden_states, prepared, *, summary_layers):
    """
    hidden_states : [L, B, S, H]  all backbone hidden states, layers first
    prepared      : dict from prepare_params() -- wf [SL,H,H] bf16, bf [1,H] f32
    returns       : [B, H] float32 == tanh(pooler(linear(concat CLS states)))
    """
    L, B, S, H = hidden_states.shape
    SL = summary_layers
    assert L >= SL
    assert prepared["wf"].shape == (SL, H, H)

    # CLS token of the last SL layers; slice + bf16 cast fuse under jit.
    cls = hidden_states[L - SL:, :, 0, :].astype(jnp.bfloat16)   # [SL, B, H]

    # Batch (M) tiling: full-extent block for small B (block == array dim, so
    # no padding needed); 256-row tiles + zero pad for large B so the leading
    # "parallel" axis has real work to shard across v7x's two TensorCores.
    if B <= 256:
        TM, Bp = B, B
    else:
        TM = 256
        Bp = ((B + TM - 1) // TM) * TM
        cls = jnp.pad(cls, ((0, 0), (0, Bp - B), (0, 0)))

    TK = _choose_tk(H)
    grid = (Bp // TM, SL, H // TK)

    wf = prepared["wf"]
    bf = prepared["bf"]

    # VMEM budget: double-buffered streamed blocks + resident bias + output.
    vmem_needed = (
        2 * (TM * TK + TK * H) * 2       # cls + Wf blocks (bf16, 2-deep)
        + 2 * H * 4                      # bias
        + 2 * TM * H * 4                 # output block (f32)
    )
    vmem_limit = int(min(64 << 20, max(4 << 20, 2 * vmem_needed)))

    flops = 2 * Bp * SL * H * H
    bytes_accessed = (
        SL * Bp * H * 2                  # activations in (bf16)
        + SL * H * H * 2                 # folded weight (bf16)
        + H * 4                          # folded bias
        + Bp * H * 4                     # output (f32)
    )

    out = pl.pallas_call(
        _summary_kernel,
        out_shape=jax.ShapeDtypeStruct((Bp, H), jnp.float32),
        grid_spec=pltpu.PrefetchScalarGridSpec(
            num_scalar_prefetch=0,
            grid=grid,
            in_specs=[
                pl.BlockSpec((1, TM, TK), lambda m, l, k: (l, m, k)),  # cls
                pl.BlockSpec((1, TK, H), lambda m, l, k: (l, k, 0)),   # Wf slab
                pl.BlockSpec((1, H), lambda m, l, k: (0, 0)),          # bias
            ],
            out_specs=pl.BlockSpec((TM, H), lambda m, l, k: (m, 0)),
        ),
        compiler_params=pltpu.CompilerParams(
            dimension_semantics=("parallel", "arbitrary", "arbitrary"),
            vmem_limit_bytes=vmem_limit,
        ),
        cost_estimate=pl.CostEstimate(
            flops=flops,
            transcendentals=Bp * H,
            bytes_accessed=bytes_accessed,
        ),
    )(cls, wf, bf)

    return out[:B]


def init_params(key, hidden_size, summary_layers):
    k1, k2, k3, k4 = jax.random.split(key, 4)
    in1 = hidden_size * summary_layers
    lim1 = 1.0 / jnp.sqrt(in1)
    lim2 = 1.0 / jnp.sqrt(hidden_size)
    return {
        # stored as [in, out] == torch weight.T
        "w1": jax.random.uniform(k1, (in1, hidden_size), jnp.float32, -lim1, lim1),
        "b1": jax.random.uniform(k2, (hidden_size,), jnp.float32, -lim1, lim1),
        "w2": jax.random.uniform(k3, (hidden_size, hidden_size), jnp.float32, -lim2, lim2),
        "b2": jax.random.uniform(k4, (hidden_size,), jnp.float32, -lim2, lim2),
    }


def reference(hidden_states, params, summary_layers):
    """Pure f32 JAX reference matching the PyTorch module."""
    L, B, S, H = hidden_states.shape
    last = hidden_states[-summary_layers:]                       # [SL, B, S, H]
    stacked = jnp.transpose(last[:, :, 0, :], (1, 0, 2))          # [B, SL, H]
    concat = stacked.reshape(B, summary_layers * H)
    resized = concat @ params["w1"] + params["b1"]
    return jnp.tanh(resized @ params["w2"] + params["b2"])


if __name__ == "__main__":
    key = jax.random.PRNGKey(0)
    k_x, k_p = jax.random.split(key)

    num_layers = 6       # L: total hidden states produced by the backbone
    summary_layers = 4   # use the last 4
    batch = 2
    seq = 8
    hidden = 32

    hidden_states = jax.random.normal(
        k_x, (num_layers, batch, seq, hidden), dtype=jnp.float32
    )
    params = init_params(k_p, hidden, summary_layers)

    # One-time, off the hot path: fold pooler into linear and cast to bf16.
    prepared = prepare_params(params, summary_layers)

    fwd = jax.jit(sequence_summary_layer, static_argnames=("summary_layers",))
    out = fwd(hidden_states, prepared, summary_layers=summary_layers)
    out = jax.block_until_ready(out)

    ref = reference(hidden_states, params, summary_layers)
    assert out.shape == (batch, hidden)
    # bf16 folded weights / bf16 activations vs. the f32 reference.
    assert jnp.allclose(out, ref, atol=2e-2, rtol=2e-2), float(
        jnp.max(jnp.abs(out - ref))
    )

    print("KERNEL_OK")
</pallas_src>

<mosaic_0001>
module attributes {stable_mosaic.version = 11 : i64} {
  func.func @_summary_kernel(%arg0: i32, %arg1: i32, %arg2: i32, %arg3: memref<1x2x32xbf16, #tpu.memory_space<vmem>>, %arg4: memref<1x32x32xbf16, #tpu.memory_space<vmem>>, %arg5: memref<1x32xf32, #tpu.memory_space<vmem>>, %arg6: memref<2x32xf32, #tpu.memory_space<vmem>>) attributes {dimension_semantics = [#tpu.dimension_semantics<parallel>, #tpu.dimension_semantics<arbitrary>, #tpu.dimension_semantics<arbitrary>], iteration_bounds = array<i64: 1, 4, 1>, scalar_prefetch = 0 : i64, scratch_operands = 0 : i64, tpu.core_type = #tpu.core_type<tc>, window_params = [{transform_indices = @transform_0, window_bounds = array<i64: 1, 2, 32>}, {transform_indices = @transform_1, window_bounds = array<i64: 1, 32, 32>}, {pipeline_mode = #tpu.pipeline_mode<synchronous>, transform_indices = @transform_2, window_bounds = array<i64: 1, 32>}, {transform_indices = @transform_3, window_bounds = array<i64: 2, 32>}]} {
    %c0_i32 = arith.constant 0 : i32
    %0 = arith.cmpi eq, %arg1, %c0_i32 : i32
    %c0_i32_0 = arith.constant 0 : i32
    %1 = arith.cmpi eq, %arg2, %c0_i32_0 : i32
    %2 = arith.andi %0, %1 : i1
    %3 = arith.extui %2 : i1 to i32
    %c0_i32_1 = arith.constant 0 : i32
    %4 = arith.cmpi ne, %3, %c0_i32_1 : i32
    scf.if %4 {
      %c0_13 = arith.constant 0 : index
      %c0_14 = arith.constant 0 : index
      %18 = vector.load %arg5[%c0_13, %c0_14] : memref<1x32xf32, #tpu.memory_space<vmem>>, vector<1x32xf32>
      %19 = vector.shape_cast %18 : vector<1x32xf32> to vector<1x32xf32>
      %20 = vector.broadcast %19 : vector<1x32xf32> to vector<2x32xf32>
      %c0_15 = arith.constant 0 : index
      %c0_16 = arith.constant 0 : index
      %21 = vector.load %arg6[%c0_15, %c0_16] : memref<2x32xf32, #tpu.memory_space<vmem>>, vector<2x32xf32>
      tpu.vector_store %arg6[%c0_15, %c0_16], %20 {strides = array<i32>} : memref<2x32xf32, #tpu.memory_space<vmem>>, vector<2x32xf32>,
    } else {
    }
    %c0 = arith.constant 0 : index
    %c0_2 = arith.constant 0 : index
    %5 = vector.load %arg6[%c0, %c0_2] : memref<2x32xf32, #tpu.memory_space<vmem>>, vector<2x32xf32>
    %c0_3 = arith.constant 0 : index
    %c0_4 = arith.constant 0 : index
    %c0_5 = arith.constant 0 : index
    %6 = vector.load %arg3[%c0_3, %c0_4, %c0_5] : memref<1x2x32xbf16, #tpu.memory_space<vmem>>, vector<1x2x32xbf16>
    %7 = vector.shape_cast %6 : vector<1x2x32xbf16> to vector<2x32xbf16>
    %c0_6 = arith.constant 0 : index
    %c0_7 = arith.constant 0 : index
    %c0_8 = arith.constant 0 : index
    %8 = vector.load %arg4[%c0_6, %c0_7, %c0_8] : memref<1x32x32xbf16, #tpu.memory_space<vmem>>, vector<1x32x32xbf16>
    %9 = vector.shape_cast %8 : vector<1x32x32xbf16> to vector<32x32xbf16>
    %cst = arith.constant dense<0.000000e+00> : vector<2x32xf32>
    %10 = tpu.matmul %7, %9, %cst {dimension_numbers = #tpu.dot_dimension_numbers<[1], [0], [0], [1], [0, 0, 1, 1], [], []>} : vector<2x32xbf16>, vector<32x32xbf16>, vector<2x32xf32> -> vector<2x32xf32>
    %11 = arith.addf %5, %10 : vector<2x32xf32>
    %c0_9 = arith.constant 0 : index
    %c0_10 = arith.constant 0 : index
    %12 = vector.load %arg6[%c0_9, %c0_10] : memref<2x32xf32, #tpu.memory_space<vmem>>, vector<2x32xf32>
    tpu.vector_store %arg6[%c0_9, %c0_10], %11 {strides = array<i32>} : memref<2x32xf32, #tpu.memory_space<vmem>>, vector<2x32xf32>,
    %c3_i32 = arith.constant 3 : i32
    %13 = arith.cmpi eq, %arg1, %c3_i32 : i32
    %c0_i32_11 = arith.constant 0 : i32
    %14 = arith.cmpi eq, %arg2, %c0_i32_11 : i32
    %15 = arith.andi %13, %14 : i1
    %16 = arith.extui %15 : i1 to i32
    %c0_i32_12 = arith.constant 0 : i32
    %17 = arith.cmpi ne, %16, %c0_i32_12 : i32
    scf.if %17 {
      %c0_13 = arith.constant 0 : index
      %c0_14 = arith.constant 0 : index
      %18 = vector.load %arg6[%c0_13, %c0_14] : memref<2x32xf32, #tpu.memory_space<vmem>>, vector<2x32xf32>
      %19 = math.tanh %18 : vector<2x32xf32>
      %c0_15 = arith.constant 0 : index
      %c0_16 = arith.constant 0 : index
      %20 = vector.load %arg6[%c0_15, %c0_16] : memref<2x32xf32, #tpu.memory_space<vmem>>, vector<2x32xf32>
      tpu.vector_store %arg6[%c0_15, %c0_16], %19 {strides = array<i32>} : memref<2x32xf32, #tpu.memory_space<vmem>>, vector<2x32xf32>,
    } else {
    }
    return
  }
  func.func @transform_0(%arg0: i32, %arg1: i32, %arg2: i32) -> (i32, i32, i32) {
    %c0_i32 = arith.constant 0 : i32
    return %arg1, %arg0, %arg2 : i32, i32, i32
  }
  func.func @transform_1(%arg0: i32, %arg1: i32, %arg2: i32) -> (i32, i32, i32) {
    %c0_i32 = arith.constant 0 : i32
    %c0_i32_0 = arith.constant 0 : i32
    return %arg1, %arg2, %c0_i32 : i32, i32, i32
  }
  func.func @transform_2(%arg0: i32, %arg1: i32, %arg2: i32) -> (i32, i32) {
    %c0_i32 = arith.constant 0 : i32
    %c0_i32_0 = arith.constant 0 : i32
    %c0_i32_1 = arith.constant 0 : i32
    return %c0_i32, %c0_i32_0 : i32, i32
  }
  func.func @transform_3(%arg0: i32, %arg1: i32, %arg2: i32) -> (i32, i32) {
    %c0_i32 = arith.constant 0 : i32
    %c0_i32_0 = arith.constant 0 : i32
    return %arg0, %c0_i32 : i32, i32
  }
}

</mosaic_0001>

<llo_original>
// kernel: sequence_summary_layer.1
$region0: #{sequence_summary_layer.1}
  #allocation0 [shape = 'u32[]', space=smem, size = 0x4, offset = 0x4, fixed_abs, tag = 'smem constant byte address 0x4 - core index']
  #allocation1 [shape = 'u32[72,128]{1,0:T(1,128)}', space=vmem, size = 0x9000, scoped, tag = 'internal scratch']
  %s0 = inlined_call_operand.vmem [shape: bf16[4,2,32], index: 0, kind: input, shape index: {}]
  %s1 = inlined_call_operand.hbm [shape: bf16[4,32,32], index: 1, kind: input, shape index: {}]
  %s2 = inlined_call_operand.vmem [shape: f32[1,32], index: 2, kind: input, shape index: {}]
  %s3 = inlined_call_operand.hbm [shape: f32[2,32], index: 3, kind: output, shape index: {}]
  %s4 = sld [smem:[#allocation0]]
  $region57: #{sequence_summary_layer.1} parent=0
    _
  %s6 = ssub.s32 1, %s4
  %s7 = scalar_select 0, %s6, %s4
  $region1: #{sequence_summary_layer.1} parent=0
    #allocation2 [shape = 'u8[16384]{0}', space=vmem, size = 0x4000, scoped, tag = 'input window, operand 1']
    #allocation3 [shape = 's32[2]{0}', space=sflag, size = 0x8, scoped, tag = 'scoped memory for sequence_summary_layer.1']
    #allocation4 [shape = 's32[2]{0}', space=sflag, size = 0x8, scoped, tag = 'scoped memory for sequence_summary_layer.1']
    #allocation5 [shape = 'u8[1024]{0}', space=vmem, size = 0x400, scoped, tag = 'output window, operand 0, single buffered']
    %8 = vsyncpa [#allocation3], 0
    %s9 = scalar_lea.sflag [#allocation3], 1
    %10 = vsyncpa %s9, 0
    %11 = vsyncpa [#allocation4], 0
    loop: start=0, step=1, limit=6
    $region2: #{sequence_summary_layer.1} parent=1 // loop_pre_header
      _
    $region3: #{sequence_summary_layer.1} parent=1 // loop_header
      %s13 = sphi 0, %s17
      %p14 = scmp.ge.s32.totalorder %s13, 6
      %s20 = sphi 0, %s39
      %s21 = sphi 0, %s35
      %s22 = sphi 0, %s31
      %s23 = sphi 0, %s20
      %s24 = sphi 0, %s21
      %s25 = sphi 0, %s22
      %s26 = sphi 0, %s23
      %s27 = sphi 0, %s24
      %s28 = sphi 0, %s25
      %s46 = sphi 0, %s48
      %s49 = sphi 0, %s46
      %s50 = sphi 0, %s49
      %s66 = sphi 0, %s50
      %s74 = sphi 0, %s76
      %s77 = sphi 0, %s74
      %s78 = sphi 0, %s77
      %s94 = sphi 0, %s78
      %s98 = sphi 0, %s98
      %s100 = sphi 0, %s98
      %s101 = sphi 0, %s100
      %s115 = sphi 0, %s101
      %s121 = sphi 0, %s123
      %s124 = sphi 0, %s121
      %s125 = sphi 0, %s124
      %s141 = sphi 0, %s125
    $region4: #{sequence_summary_layer.1} parent=1 // loop_header_branch
      %16 = sbr.rel (%p14) target = $region8
    $region5: #{sequence_summary_layer.1} parent=1 // loop_body
      %s18 = ssub.s32 %s13, 1
      %s19 = ssub.s32 %s13, 2
      %s29 = sadd.s32 1, %s22
      %p30 = scmp.ge.s32.totalorder %s29, 1
      %s31 = scalar_select %p30, 0, %s29
      %s32 = sadd.s32 1, %s21
      %s33 = scalar_select %p30, %s32, %s21
      %p34 = scmp.ge.s32.totalorder %s33, 4
      %s35 = scalar_select %p34, 0, %s33
      %s36 = sadd.s32 1, %s20
      %s37 = scalar_select %p34, %s36, %s20
      %p38 = scmp.ge.s32.totalorder %s37, 1
      %s39 = scalar_select %p38, 0, %s37
      %s40 = ssub.s32 %s21, %s35
      %s41 = ssub.s32 %s20, %s39
      %s42 = sor.u32 %s40, %s41
      %s43 = ssub.s32 %s22, %s31
      %s44 = sor.u32 %s42, %s43
      %p45 = scmp.eq.s32.totalorder %s44, 0
      %s47 = sadd.s32 %s46, 1
      %s48 = scalar_select %p45, %s46, %s47
      %p51 = pneg %p45
      %p52 = scmp.eq.s32.totalorder %s13, 3
      %p53 = por %p51, %p52
      %p54 = scmp.ne.s32.totalorder %s46, %s49
      %p55 = scmp.eq.s32.totalorder %s13, 0
      %p56 = por %p54, %p55
      %p57 = scmp.ne.s32.totalorder %s46, %s49
      %p58 = scmp.eq.s32.totalorder %s18, 3
      %p59 = por %p57, %p58
      %p60 = scmp.ne.s32.totalorder %s49, %s50
      %p61 = scmp.eq.s32.totalorder %s18, 0
      %p62 = por %p60, %p61
      %p63 = scmp.ne.s32.totalorder %s49, %s50
      %p64 = scmp.eq.s32.totalorder %s19, 3
      %p65 = por %p63, %p64
      %p67 = scmp.ne.s32.totalorder %s50, %s66
      %p68 = scmp.eq.s32.totalorder %s19, 0
      %p69 = por %p67, %p68
      %s70 = ssub.s32 %s21, %s35
      %s71 = ssub.s32 %s22, %s31
      %s72 = sor.u32 %s70, %s71
      %p73 = scmp.eq.s32.totalorder %s72, 0
      %s75 = sadd.s32 %s74, 1
      %s76 = scalar_select %p73, %s74, %s75
      %p79 = pneg %p73
      %p80 = scmp.eq.s32.totalorder %s13, 3
      %p81 = por %p79, %p80
      %p82 = scmp.ne.s32.totalorder %s74, %s77
      %p83 = scmp.eq.s32.totalorder %s13, 0
      %p84 = por %p82, %p83
      %p85 = scmp.ne.s32.totalorder %s74, %s77
      %p86 = scmp.eq.s32.totalorder %s18, 3
      %p87 = por %p85, %p86
      %p88 = scmp.ne.s32.totalorder %s77, %s78
      %p89 = scmp.eq.s32.totalorder %s18, 0
      %p90 = por %p88, %p89
      %p91 = scmp.ne.s32.totalorder %s77, %s78
      %p92 = scmp.eq.s32.totalorder %s19, 3
      %p93 = por %p91, %p92
      %p95 = scmp.ne.s32.totalorder %s78, %s94
      %p96 = scmp.eq.s32.totalorder %s19, 0
      %p97 = por %p95, %p96
      %s99 = sadd.s32 %s98, 1
      %p102 = scmp.eq.s32.totalorder %s13, 3
      %p103 = scmp.ne.s32.totalorder %s98, %s100
      %p104 = scmp.eq.s32.totalorder %s13, 0
      %p105 = por %p103, %p104
      %p106 = scmp.ne.s32.totalorder %s98, %s100
      %p107 = scmp.eq.s32.totalorder %s18, 3
      %p108 = por %p106, %p107
      %p109 = scmp.ne.s32.totalorder %s100, %s101
      %p110 = scmp.eq.s32.totalorder %s18, 0
      %p111 = por %p109, %p110
      %p112 = scmp.ne.s32.totalorder %s100, %s101
      %p113 = scmp.eq.s32.totalorder %s19, 3
      %p114 = por %p112, %p113
      %p116 = scmp.ne.s32.totalorder %s101, %s115
      %p117 = scmp.eq.s32.totalorder %s19, 0
      %p118 = por %p116, %p117
      %s119 = ssub.s32 %s20, %s39
      %p120 = scmp.eq.s32.totalorder %s119, 0
      %s122 = sadd.s32 %s121, 1
      %s123 = scalar_select %p120, %s121, %s122
      %p126 = pneg %p120
      %p127 = scmp.eq.s32.totalorder %s13, 3
      %p128 = por %p126, %p127
      %p129 = scmp.ne.s32.totalorder %s121, %s124
      %p130 = scmp.eq.s32.totalorder %s13, 0
      %p131 = por %p129, %p130
      %p132 = scmp.ne.s32.totalorder %s121, %s124
      %p133 = scmp.eq.s32.totalorder %s18, 3
      %p134 = por %p132, %p133
      %p135 = scmp.ne.s32.totalorder %s124, %s125
      %p136 = scmp.eq.s32.totalorder %s18, 0
      %p137 = por %p135, %p136
      %p138 = scmp.ne.s32.totalorder %s124, %s125
      %p139 = scmp.eq.s32.totalorder %s19, 3
      %p140 = por %p138, %p139
      %p142 = scmp.ne.s32.totalorder %s125, %s141
      %p143 = scmp.eq.s32.totalorder %s19, 0
      %p144 = por %p142, %p143
      %p145 = scmp.le.s32.totalorder 1, %s13
      %p146 = scmp.lt.s32.totalorder %s13, 5
      %p147 = pnand %p145, %p146
      %p148 = pneg %p147
      // Predicated region
      $region9: #{sequence_summary_layer.1} parent=5 // pred_check
        _
      $region10: #{sequence_summary_layer.1} parent=5 // pred_check_branch
        %150 = sbr.rel (%p147) target = $region12
      $region11: #{sequence_summary_layer.1} parent=5 // pred_region
        %s151 = ssub.s32 %s13, 1
        // Predicated region
        $region13: #{sequence_summary_layer.1} parent=11 // pred_check
          %p152 = pneg %p111
        $region14: #{sequence_summary_layer.1} parent=11 // pred_check_branch
          %154 = sbr.rel (%p152) target = $region16
        $region15: #{sequence_summary_layer.1} parent=11 // pred_region
          _
        $region16: #{sequence_summary_layer.1} parent=11 // pred_fallthru
          _
      $region12: #{sequence_summary_layer.1} parent=5 // pred_fallthru
        _
      %p155 = scmp.lt.s32.totalorder %s13, 4
      // Predicated region
      $region17: #{sequence_summary_layer.1} parent=5 // pred_check
        %p156 = pneg %p155
      $region18: #{sequence_summary_layer.1} parent=5 // pred_check_branch
        %158 = sbr.rel (%p156) target = $region20
      $region19: #{sequence_summary_layer.1} parent=5 // pred_region
        // Predicated region
        $region21: #{sequence_summary_layer.1} parent=19 // pred_check
          %p159 = pneg %p56
        $region22: #{sequence_summary_layer.1} parent=19 // pred_check_branch
          %161 = sbr.rel (%p159) target = $region24
        $region23: #{sequence_summary_layer.1} parent=19 // pred_region
          %p162 = scmp.lt.s32.totalorder %s21, 3
          %s163 = scalar_select %p162, %s21, 3
          %p164 = scmp.lt.s32.totalorder %s20, 0
          %s165 = scalar_select %p164, %s20, 0
          %p166 = scmp.lt.s32.totalorder %s22, 0
          %s167 = scalar_select %p166, %s22, 0
          %s168 = sadd.s32 %s167, %s165
          %s169 = sadd.s32 %s168, %s163
          %s170 = scalar_lea.vmem %s0, %s169
        $region24: #{sequence_summary_layer.1} parent=19 // pred_fallthru
          _
        // Predicated region
        $region25: #{sequence_summary_layer.1} parent=19 // pred_check
          %p171 = pneg %p84
        $region26: #{sequence_summary_layer.1} parent=19 // pred_check_branch
          %173 = sbr.rel (%p171) target = $region28
        $region27: #{sequence_summary_layer.1} parent=19 // pred_region
          %s174 = sand.u32 %s74, 1
          %s175 = scalar_lea.sflag [#allocation3], %s174
          %s176 = sand.u32 %s74, 1
          %s177 = smul.addr %s176, 16
          %s178 = scalar_lea.vmem [#allocation2], %s177
          %s179 = smul.u32 4, %s22
          %181 = vsyncadd %s175, 0
          %s182 = smul.addr %s21, 4
          %s183 = sadd.s32 %s179, %s182
          %s184 = smul.addr %s183, 4
          %s185 = scalar_lea.hbm %s1, %s184
          %s186 = sshll.u32 %s185, 4
          %s187 = int_to_ptr.hbm [resolvable:$true] %s186
          %s188 = sshll.u32 %s178, 4
          %s189 = int_to_ptr.vmem [resolvable:$true] %s188
          %194 = dma.hbm_to_vmem [thread:$0]  %s187, 256, %s189, %s175, 64, 64, 4
        $region28: #{sequence_summary_layer.1} parent=19 // pred_fallthru
          _
      $region20: #{sequence_summary_layer.1} parent=5 // pred_fallthru
        _
      %p195 = scmp.le.s32.totalorder 1, %s13
      %p196 = scmp.lt.s32.totalorder %s13, 5
      %p197 = pnand %p195, %p196
      %p198 = pneg %p197
      // Predicated region
      $region29: #{sequence_summary_layer.1} parent=5 // pred_check
        _
      $region30: #{sequence_summary_layer.1} parent=5 // pred_check_branch
        %200 = sbr.rel (%p197) target = $region32
      $region31: #{sequence_summary_layer.1} parent=5 // pred_region
        %s201 = ssub.s32 %s13, 1
        %s202 = sand.u32 %s77, 1
        %s203 = scalar_lea.sflag [#allocation3], %s202
        %s204 = sand.u32 %s77, 1
        %s205 = smul.addr %s204, 16
        %s206 = scalar_lea.vmem [#allocation2], %s205
        // Predicated region
        $region33: #{sequence_summary_layer.1} parent=31 // pred_check
          %p207 = pneg %p90
        $region34: #{sequence_summary_layer.1} parent=31 // pred_check_branch
          %209 = sbr.rel (%p207) target = $region36
        $region35: #{sequence_summary_layer.1} parent=31 // pred_region
          %211 = dma.done %s203, 256
        $region36: #{sequence_summary_layer.1} parent=31 // pred_fallthru
          _
        %p212 = scmp.lt.s32.totalorder %s24, 3
        %s213 = scalar_select %p212, %s24, 3
        %p214 = scmp.lt.s32.totalorder %s23, 0
        %s215 = scalar_select %p214, %s23, 0
        %p216 = scmp.lt.s32.totalorder %s25, 0
        %s217 = scalar_select %p216, %s25, 0
        %s218 = sadd.s32 %s217, %s215
        %s219 = sadd.s32 %s218, %s213
        %s220 = scalar_lea.vmem %s0, %s219
        %p221 = pneg %p62
        %p222 = pneg %p59
        %s223 = sand.u32 %s77, 1
        %s224 = scalar_lea.sflag [#allocation3], %s223
        %s225 = sand.u32 %s77, 1
        %s226 = smul.addr %s225, 16
        %s227 = scalar_lea.vmem [#allocation2], %s226
        %p228 = pneg %p90
        %p229 = pneg %p87
        %p230 = pneg %p111
        %p231 = pneg %p108
        %p232 = pneg %p137
        %p233 = pneg %p134
        %p234 = scmp.lt.s32.totalorder %s24, 3
        %s235 = scalar_select %p234, %s24, 3
        %p236 = scmp.lt.s32.totalorder %s23, 0
        %s237 = scalar_select %p236, %s23, 0
        %p238 = scmp.lt.s32.totalorder %s25, 0
        %s239 = scalar_select %p238, %s25, 0
        %s240 = sadd.s32 %s239, %s237
        %s241 = sadd.s32 %s240, %s235
        %s242 = scalar_lea.vmem %s0, %s241
        %s243 = smul.u32 4, %s25
        %p245 = scmp.eq.s32.totalorder %s24, 0
        %p246 = scmp.eq.s32.totalorder %s25, 0
        %p247 = pnand %p245, %p246
        %p248 = pneg %p247
        // Predicated region
        $region37: #{sequence_summary_layer.1} parent=31 // pred_check
          _
        $region38: #{sequence_summary_layer.1} parent=31 // pred_check_branch
          %250 = sbr.rel (%p247) target = $region40
        $region39: #{sequence_summary_layer.1} parent=31 // pred_region
          %v251 = vld [vmem:[%s2] sm:$0x1]
          %v253 = vperm.slane %v251, 0
          %vm255 = vcmask 254976
          %256 = vst.msk [vmem:[#allocation5] sm:$0x3] %vm255, %v253
        $region40: #{sequence_summary_layer.1} parent=31 // pred_fallthru
          _
        %v257 = vld [vmem:[#allocation5] sm:$0x3]
        %v258 = vld [vmem:[%s242] sm:$0x1]
        %v259 = vld [vmem:[%s206] sm:$0xf]
        %v260 = vld [vmem:[%s206 + $0x4] sm:$0xf]
        %v261 = vld [vmem:[%s206 + $0x8] sm:$0xf]
        %v262 = vld [vmem:[%s206 + $0xc] sm:$0xf]
        %v267 = vunpack.c.l.b16 %v259
        %v268 = vunpack.c.l.b16 %v260
        %v269 = vunpack.c.l.b16 %v261
        %v270 = vunpack.c.l.b16 %v262
        %v271 = vpack.c.b16 %v268, %v267
        %v272 = vpack.c.b16 %v270, %v269
        %vm275 = vcmask 261120
        %v277 = vsel %vm275, %v258, 0
        %279 = vmatpush.bf16.msra.mxu0 0
        %280 = vmatpush.bf16.msra.mxu0 0
        %281 = vmatpush.bf16.msra.mxu0 0
        %282 = vmatpush.bf16.msra.mxu0 0
        %283 = vmatpush.bf16.msra.mxu0 0
        %284 = vmatpush.bf16.msra.mxu0 0
        %285 = vmatpush.bf16.msra.mxu0 %v272
        %286 = vmatpush.bf16.msra.mxu0 %v271
        %287 = vmatmul.bf16.gmra.mxu0 %v277
        %v288 = vpop.f32.mrf.mxu0
        %v289 = vadd.f32 0.0, %v288
        %v290 = vpop.f32.mrf.mxu0
        %291 = vdwg.mxu0
        %v292 = vadd.f32 %v257, %v289
        %vm293 = vcmask 254976
        %294 = vst.msk [vmem:[#allocation5] sm:$0x3] %vm293, %v292
        %p295 = scmp.eq.s32.totalorder %s24, 3
        %p296 = pnand %p295, %p246
        %p297 = pneg %p296
        // Predicated region
        $region41: #{sequence_summary_layer.1} parent=31 // pred_check
          _
        $region42: #{sequence_summary_layer.1} parent=31 // pred_check_branch
          %299 = sbr.rel (%p296) target = $region44
        $region43: #{sequence_summary_layer.1} parent=31 // pred_region
          %v300 = vld [vmem:[#allocation5] sm:$0x3]
          %v301 = vtanh.pop %v300
          %302 = vst.msk [vmem:[#allocation5] sm:$0x3] %vm293, %v301
        $region44: #{sequence_summary_layer.1} parent=31 // pred_fallthru
          _
        // Predicated region
        $region45: #{sequence_summary_layer.1} parent=31 // pred_check
          %p303 = pneg %p134
        $region46: #{sequence_summary_layer.1} parent=31 // pred_check_branch
          %305 = sbr.rel (%p303) target = $region48
        $region47: #{sequence_summary_layer.1} parent=31 // pred_region
          %307 = vsyncadd [#allocation4], 0
          %s308 = smul.addr %s23, 2
          %s309 = scalar_lea.hbm %s3, %s308
          %s311 = sshll.u32 [#allocation5], 4
          %s312 = int_to_ptr.vmem [resolvable:$true] %s311
          %s313 = sshll.u32 %s309, 4
          %s314 = int_to_ptr.hbm [resolvable:$true] %s313
          %316 = dma.vmem_to_hbm [thread:$0]  %s312, 32, %s314, [#allocation4]
        $region48: #{sequence_summary_layer.1} parent=31 // pred_fallthru
          _
        // Predicated region
        $region49: #{sequence_summary_layer.1} parent=31 // pred_check
          %p317 = pneg %p134
        $region50: #{sequence_summary_layer.1} parent=31 // pred_check_branch
          %319 = sbr.rel (%p317) target = $region52
        $region51: #{sequence_summary_layer.1} parent=31 // pred_region
          %321 = dma.done [#allocation4], 32
        $region52: #{sequence_summary_layer.1} parent=31 // pred_fallthru
          _
      $region32: #{sequence_summary_layer.1} parent=5 // pred_fallthru
        _
      %p322 = scmp.le.s32.totalorder 2, %s13
      // Predicated region
      $region53: #{sequence_summary_layer.1} parent=5 // pred_check
        %p323 = pneg %p322
      $region54: #{sequence_summary_layer.1} parent=5 // pred_check_branch
        %325 = sbr.rel (%p323) target = $region56
      $region55: #{sequence_summary_layer.1} parent=5 // pred_region
        %s326 = ssub.s32 %s13, 2
      $region56: #{sequence_summary_layer.1} parent=5 // pred_fallthru
        _
    $region6: #{sequence_summary_layer.1} parent=1 // loop_footer
      %s17 = sadd.s32 1, %s13
    $region7: #{sequence_summary_layer.1} parent=1 // loop_footer_branch
      %12 = sbr.rel target = $region3
    $region8: #{sequence_summary_layer.1} parent=1 // loop_exit
      _
    %327 = vsyncpa [#allocation3], 1
    %s328 = scalar_lea.sflag [#allocation3], 1
    %329 = vsyncpa %s328, 1
    %330 = vsyncpa [#allocation4], 1
    %s331 = scalar_lea.sflag [#allocation4], 1
    %332 = vsyncpa %s331, 1

</llo_original>
